<compile_context>
chip_gen: v5e
topology: v5e:2x2
jax: 0.10.0
libtpu: 0.0.40
codegen_flags: <defaults>
</compile_context>

<pallas_src>
import jax
import jax.numpy as jnp
from jax.experimental import pallas as pl
from jax.experimental.pallas import tpu as pltpu

LANE = 128             # samples packed along lanes
SLAB_ROWS = 32         # rows per in-kernel compute slab (4 f32 vregs / value)
MAX_TILE_ROWS = 2048   # cap: 1 MiB in + 1 MiB out per grid step
TARGET_GRID_STEPS = 8  # enough steps to pipeline DMA and feed both v7x cores


def _round_up(a, m):
    return ((a + m - 1) // m) * m


def _mlp_kernel(x_ref, w1_ref, b1_ref, w2_ref, b2_ref, w3_ref, b3_ref, o_ref):
    H = w1_ref.shape[0]

    # Hoist all 46 SMEM scalar loads out of the slab loop.
    w1 = [w1_ref[i] for i in range(H)]
    b1 = [b1_ref[i] for i in range(H)]
    w2 = [[w2_ref[i * H + j] for j in range(H)] for i in range(H)]
    b2 = [b2_ref[i] for i in range(H)]
    w3 = [w3_ref[i] for i in range(H)]
    b3 = b3_ref[0]

    def slab(r0, nrows):
        x = x_ref[pl.ds(r0, nrows), :]                    # (nrows, 128) lane-packed

        # Layer 1: Linear(1,H) + ReLU -> H broadcast FMAs on the VPU.
        h1 = [jnp.maximum(x * w1[i] + b1[i], 0.0) for i in range(H)]

        # Layer 2: Linear(H,H) + ReLU -> H*H unrolled broadcast FMAs.
        h2 = []
        for i in range(H):
            s = h1[0] * w2[i][0]
            for j in range(1, H):
                s = s + h1[j] * w2[i][j]
            h2.append(jnp.maximum(s + b2[i], 0.0))

        # Layer 3: Linear(H,1) -> reduction over the H hidden activations.
        out = h2[0] * w3[0]
        for i in range(1, H):
            out = out + h2[i] * w3[i]
        o_ref[pl.ds(r0, nrows), :] = (out + b3).astype(o_ref.dtype)

    tile_r = x_ref.shape[0]
    n_full = tile_r // SLAB_ROWS
    if n_full > 0:
        @pl.loop(0, n_full)
        def _(s):
            slab(pl.multiple_of(s * SLAB_ROWS, SLAB_ROWS), SLAB_ROWS)

    rem = tile_r % SLAB_ROWS                               # multiple of 8 by construction
    if rem:
        slab(n_full * SLAB_ROWS, rem)


@jax.jit
def basic_network_forward(x, fparams):
    """x: (B, 1) float32.  fparams: output of prepare_params (flat, SMEM-friendly)."""
    B = x.shape[0]
    rows = -(-B // LANE)                        # lane-rows of 128 samples
    rows_p = _round_up(rows, 8)                 # pad only to sublane multiple (<=3.5 KiB)

    # tile_r sized from the batch so the grid has ~TARGET_GRID_STEPS steps.
    tile_r = max(8, min(MAX_TILE_ROWS,
                        _round_up(-(-rows_p // TARGET_GRID_STEPS), 8)))
    grid = -(-rows_p // tile_r)                 # last block may be partial (masked)

    n_pad = rows_p * LANE - B
    x_flat = x.reshape(B).astype(jnp.float32)
    if n_pad:                                   # skip the pad copy when already aligned
        x_flat = jnp.pad(x_flat, (0, n_pad))
    x_packed = x_flat.reshape(rows_p, LANE)

    smem = pl.BlockSpec(memory_space=pltpu.MemorySpace.SMEM)
    act_spec = pl.BlockSpec((tile_r, LANE), lambda i: (i, 0))

    out_p = pl.pallas_call(
        _mlp_kernel,
        out_shape=jax.ShapeDtypeStruct((rows_p, LANE), jnp.float32),
        grid=(grid,),
        in_specs=[act_spec, smem, smem, smem, smem, smem, smem],
        out_specs=act_spec,
        compiler_params=pltpu.CompilerParams(dimension_semantics=("parallel",)),
    )(x_packed, fparams["w1"], fparams["b1"], fparams["w2"],
      fparams["b2"], fparams["w3"], fparams["b3"])

    out_flat = out_p.reshape(rows_p * LANE)
    if n_pad:                                   # skip the slice copy when already aligned
        out_flat = out_flat[:B]
    return out_flat.reshape(B, 1)


def prepare_params(params):
    """One-time repack of PyTorch-layout params into flat scalar vectors (SMEM)."""
    return {
        "w1": params["w1"][:, 0],           # (H,1) -> (H,)
        "b1": params["b1"],                 # (H,)
        "w2": params["w2"].reshape(-1),     # (H,H) (out,in), row-major -> (H*H,)
        "b2": params["b2"],                 # (H,)
        "w3": params["w3"][0, :],           # (1,H) -> (H,)
        "b3": params["b3"],                 # (1,)
    }


def init_params(key, n_neurons=5):
    """Deterministic init mirroring nn.Linear default (uniform +/- 1/sqrt(fan_in))."""
    keys = jax.random.split(key, 6)

    def lin(kw, kb, fan_in, fan_out):
        bound = 1.0 / jnp.sqrt(float(fan_in))
        w = jax.random.uniform(kw, (fan_out, fan_in), jnp.float32, -bound, bound)
        b = jax.random.uniform(kb, (fan_out,), jnp.float32, -bound, bound)
        return w, b

    w1, b1 = lin(keys[0], keys[1], 1, n_neurons)
    w2, b2 = lin(keys[2], keys[3], n_neurons, n_neurons)
    w3, b3 = lin(keys[4], keys[5], n_neurons, 1)
    return {"w1": w1, "b1": b1, "w2": w2, "b2": b2, "w3": w3, "b3": b3}


def reference_forward(x, params):
    mm = lambda a, b: jnp.matmul(a, b, precision=jax.lax.Precision.HIGHEST)
    h = jnp.maximum(mm(x, params["w1"].T) + params["b1"], 0.0)
    h = jnp.maximum(mm(h, params["w2"].T) + params["b2"], 0.0)
    return mm(h, params["w3"].T) + params["b3"]


if __name__ == "__main__":
    key = jax.random.PRNGKey(0)
    k_x, k_p = jax.random.split(key)

    n_neurons = 5
    params = init_params(k_p, n_neurons)
    fparams = prepare_params(params)

    # batch=200: padding path, single grid step, single partial slab.
    # batch=33000: multi-step grid, full pl.loop slabs + remainder slab,
    #              partial last grid block.  Both are tiny (<= 132 KB).
    for batch in (200, 33000):
        x = jax.random.normal(jax.random.fold_in(k_x, batch), (batch, 1), jnp.float32)
        out = jax.block_until_ready(basic_network_forward(x, fparams))
        ref = reference_forward(x, params)
        assert out.shape == (batch, 1), out.shape
        assert jnp.allclose(out, ref, atol=1e-5, rtol=1e-5), (
            batch, float(jnp.max(jnp.abs(out - ref))))

    print("KERNEL_OK")
</pallas_src>

<mosaic_0001>
module attributes {stable_mosaic.version = 11 : i64} {
  func.func @_mlp_kernel(%arg0: i32, %arg1: memref<8x128xf32, #tpu.memory_space<vmem>>, %arg2: memref<5xf32, #tpu.memory_space<smem>>, %arg3: memref<5xf32, #tpu.memory_space<smem>>, %arg4: memref<25xf32, #tpu.memory_space<smem>>, %arg5: memref<5xf32, #tpu.memory_space<smem>>, %arg6: memref<5xf32, #tpu.memory_space<smem>>, %arg7: memref<1xf32, #tpu.memory_space<smem>>, %arg8: memref<8x128xf32, #tpu.memory_space<vmem>>) attributes {dimension_semantics = [#tpu.dimension_semantics<parallel>], iteration_bounds = array<i64: 1>, scalar_prefetch = 0 : i64, scratch_operands = 0 : i64, tpu.core_type = #tpu.core_type<tc>, window_params = [{transform_indices = @transform_0, window_bounds = array<i64: 8, 128>}, {transform_indices = @transform_1, window_bounds = array<i64: 5>}, {transform_indices = @transform_2, window_bounds = array<i64: 5>}, {transform_indices = @transform_3, window_bounds = array<i64: 25>}, {transform_indices = @transform_4, window_bounds = array<i64: 5>}, {transform_indices = @transform_5, window_bounds = array<i64: 5>}, {transform_indices = @transform_6, window_bounds = array<i64: 1>}, {transform_indices = @transform_7, window_bounds = array<i64: 8, 128>}]} {
    %c0 = arith.constant 0 : index
    %0 = memref.load %arg2[%c0] : memref<5xf32, #tpu.memory_space<smem>>
    %c1 = arith.constant 1 : index
    %1 = memref.load %arg2[%c1] : memref<5xf32, #tpu.memory_space<smem>>
    %c2 = arith.constant 2 : index
    %2 = memref.load %arg2[%c2] : memref<5xf32, #tpu.memory_space<smem>>
    %c3 = arith.constant 3 : index
    %3 = memref.load %arg2[%c3] : memref<5xf32, #tpu.memory_space<smem>>
    %c4 = arith.constant 4 : index
    %4 = memref.load %arg2[%c4] : memref<5xf32, #tpu.memory_space<smem>>
    %c0_0 = arith.constant 0 : index
    %5 = memref.load %arg3[%c0_0] : memref<5xf32, #tpu.memory_space<smem>>
    %c1_1 = arith.constant 1 : index
    %6 = memref.load %arg3[%c1_1] : memref<5xf32, #tpu.memory_space<smem>>
    %c2_2 = arith.constant 2 : index
    %7 = memref.load %arg3[%c2_2] : memref<5xf32, #tpu.memory_space<smem>>
    %c3_3 = arith.constant 3 : index
    %8 = memref.load %arg3[%c3_3] : memref<5xf32, #tpu.memory_space<smem>>
    %c4_4 = arith.constant 4 : index
    %9 = memref.load %arg3[%c4_4] : memref<5xf32, #tpu.memory_space<smem>>
    %c0_5 = arith.constant 0 : index
    %10 = memref.load %arg4[%c0_5] : memref<25xf32, #tpu.memory_space<smem>>
    %c1_6 = arith.constant 1 : index
    %11 = memref.load %arg4[%c1_6] : memref<25xf32, #tpu.memory_space<smem>>
    %c2_7 = arith.constant 2 : index
    %12 = memref.load %arg4[%c2_7] : memref<25xf32, #tpu.memory_space<smem>>
    %c3_8 = arith.constant 3 : index
    %13 = memref.load %arg4[%c3_8] : memref<25xf32, #tpu.memory_space<smem>>
    %c4_9 = arith.constant 4 : index
    %14 = memref.load %arg4[%c4_9] : memref<25xf32, #tpu.memory_space<smem>>
    %c5 = arith.constant 5 : index
    %15 = memref.load %arg4[%c5] : memref<25xf32, #tpu.memory_space<smem>>
    %c6 = arith.constant 6 : index
    %16 = memref.load %arg4[%c6] : memref<25xf32, #tpu.memory_space<smem>>
    %c7 = arith.constant 7 : index
    %17 = memref.load %arg4[%c7] : memref<25xf32, #tpu.memory_space<smem>>
    %c8 = arith.constant 8 : index
    %18 = memref.load %arg4[%c8] : memref<25xf32, #tpu.memory_space<smem>>
    %c9 = arith.constant 9 : index
    %19 = memref.load %arg4[%c9] : memref<25xf32, #tpu.memory_space<smem>>
    %c10 = arith.constant 10 : index
    %20 = memref.load %arg4[%c10] : memref<25xf32, #tpu.memory_space<smem>>
    %c11 = arith.constant 11 : index
    %21 = memref.load %arg4[%c11] : memref<25xf32, #tpu.memory_space<smem>>
    %c12 = arith.constant 12 : index
    %22 = memref.load %arg4[%c12] : memref<25xf32, #tpu.memory_space<smem>>
    %c13 = arith.constant 13 : index
    %23 = memref.load %arg4[%c13] : memref<25xf32, #tpu.memory_space<smem>>
    %c14 = arith.constant 14 : index
    %24 = memref.load %arg4[%c14] : memref<25xf32, #tpu.memory_space<smem>>
    %c15 = arith.constant 15 : index
    %25 = memref.load %arg4[%c15] : memref<25xf32, #tpu.memory_space<smem>>
    %c16 = arith.constant 16 : index
    %26 = memref.load %arg4[%c16] : memref<25xf32, #tpu.memory_space<smem>>
    %c17 = arith.constant 17 : index
    %27 = memref.load %arg4[%c17] : memref<25xf32, #tpu.memory_space<smem>>
    %c18 = arith.constant 18 : index
    %28 = memref.load %arg4[%c18] : memref<25xf32, #tpu.memory_space<smem>>
    %c19 = arith.constant 19 : index
    %29 = memref.load %arg4[%c19] : memref<25xf32, #tpu.memory_space<smem>>
    %c20 = arith.constant 20 : index
    %30 = memref.load %arg4[%c20] : memref<25xf32, #tpu.memory_space<smem>>
    %c21 = arith.constant 21 : index
    %31 = memref.load %arg4[%c21] : memref<25xf32, #tpu.memory_space<smem>>
    %c22 = arith.constant 22 : index
    %32 = memref.load %arg4[%c22] : memref<25xf32, #tpu.memory_space<smem>>
    %c23 = arith.constant 23 : index
    %33 = memref.load %arg4[%c23] : memref<25xf32, #tpu.memory_space<smem>>
    %c24 = arith.constant 24 : index
    %34 = memref.load %arg4[%c24] : memref<25xf32, #tpu.memory_space<smem>>
    %c0_10 = arith.constant 0 : index
    %35 = memref.load %arg5[%c0_10] : memref<5xf32, #tpu.memory_space<smem>>
    %c1_11 = arith.constant 1 : index
    %36 = memref.load %arg5[%c1_11] : memref<5xf32, #tpu.memory_space<smem>>
    %c2_12 = arith.constant 2 : index
    %37 = memref.load %arg5[%c2_12] : memref<5xf32, #tpu.memory_space<smem>>
    %c3_13 = arith.constant 3 : index
    %38 = memref.load %arg5[%c3_13] : memref<5xf32, #tpu.memory_space<smem>>
    %c4_14 = arith.constant 4 : index
    %39 = memref.load %arg5[%c4_14] : memref<5xf32, #tpu.memory_space<smem>>
    %c0_15 = arith.constant 0 : index
    %40 = memref.load %arg6[%c0_15] : memref<5xf32, #tpu.memory_space<smem>>
    %c1_16 = arith.constant 1 : index
    %41 = memref.load %arg6[%c1_16] : memref<5xf32, #tpu.memory_space<smem>>
    %c2_17 = arith.constant 2 : index
    %42 = memref.load %arg6[%c2_17] : memref<5xf32, #tpu.memory_space<smem>>
    %c3_18 = arith.constant 3 : index
    %43 = memref.load %arg6[%c3_18] : memref<5xf32, #tpu.memory_space<smem>>
    %c4_19 = arith.constant 4 : index
    %44 = memref.load %arg6[%c4_19] : memref<5xf32, #tpu.memory_space<smem>>
    %c0_20 = arith.constant 0 : index
    %45 = memref.load %arg7[%c0_20] : memref<1xf32, #tpu.memory_space<smem>>
    %c0_21 = arith.constant 0 : index
    %c0_22 = arith.constant 0 : index
    %46 = vector.load %arg1[%c0_21, %c0_22] : memref<8x128xf32, #tpu.memory_space<vmem>>, vector<8x128xf32>
    %47 = vector.broadcast %0 : f32 to vector<8x128xf32>
    %48 = arith.mulf %46, %47 : vector<8x128xf32>
    %49 = vector.broadcast %5 : f32 to vector<8x128xf32>
    %50 = arith.addf %48, %49 : vector<8x128xf32>
    %cst = arith.constant 0.000000e+00 : f32
    %51 = vector.broadcast %cst : f32 to vector<8x128xf32>
    %52 = arith.maximumf %50, %51 : vector<8x128xf32>
    %53 = vector.broadcast %1 : f32 to vector<8x128xf32>
    %54 = arith.mulf %46, %53 : vector<8x128xf32>
    %55 = vector.broadcast %6 : f32 to vector<8x128xf32>
    %56 = arith.addf %54, %55 : vector<8x128xf32>
    %cst_23 = arith.constant 0.000000e+00 : f32
    %57 = vector.broadcast %cst_23 : f32 to vector<8x128xf32>
    %58 = arith.maximumf %56, %57 : vector<8x128xf32>
    %59 = vector.broadcast %2 : f32 to vector<8x128xf32>
    %60 = arith.mulf %46, %59 : vector<8x128xf32>
    %61 = vector.broadcast %7 : f32 to vector<8x128xf32>
    %62 = arith.addf %60, %61 : vector<8x128xf32>
    %cst_24 = arith.constant 0.000000e+00 : f32
    %63 = vector.broadcast %cst_24 : f32 to vector<8x128xf32>
    %64 = arith.maximumf %62, %63 : vector<8x128xf32>
    %65 = vector.broadcast %3 : f32 to vector<8x128xf32>
    %66 = arith.mulf %46, %65 : vector<8x128xf32>
    %67 = vector.broadcast %8 : f32 to vector<8x128xf32>
    %68 = arith.addf %66, %67 : vector<8x128xf32>
    %cst_25 = arith.constant 0.000000e+00 : f32
    %69 = vector.broadcast %cst_25 : f32 to vector<8x128xf32>
    %70 = arith.maximumf %68, %69 : vector<8x128xf32>
    %71 = vector.broadcast %4 : f32 to vector<8x128xf32>
    %72 = arith.mulf %46, %71 : vector<8x128xf32>
    %73 = vector.broadcast %9 : f32 to vector<8x128xf32>
    %74 = arith.addf %72, %73 : vector<8x128xf32>
    %cst_26 = arith.constant 0.000000e+00 : f32
    %75 = vector.broadcast %cst_26 : f32 to vector<8x128xf32>
    %76 = arith.maximumf %74, %75 : vector<8x128xf32>
    %77 = vector.broadcast %10 : f32 to vector<8x128xf32>
    %78 = arith.mulf %52, %77 : vector<8x128xf32>
    %79 = vector.broadcast %11 : f32 to vector<8x128xf32>
    %80 = arith.mulf %58, %79 : vector<8x128xf32>
    %81 = arith.addf %78, %80 : vector<8x128xf32>
    %82 = vector.broadcast %12 : f32 to vector<8x128xf32>
    %83 = arith.mulf %64, %82 : vector<8x128xf32>
    %84 = arith.addf %81, %83 : vector<8x128xf32>
    %85 = vector.broadcast %13 : f32 to vector<8x128xf32>
    %86 = arith.mulf %70, %85 : vector<8x128xf32>
    %87 = arith.addf %84, %86 : vector<8x128xf32>
    %88 = vector.broadcast %14 : f32 to vector<8x128xf32>
    %89 = arith.mulf %76, %88 : vector<8x128xf32>
    %90 = arith.addf %87, %89 : vector<8x128xf32>
    %91 = vector.broadcast %35 : f32 to vector<8x128xf32>
    %92 = arith.addf %90, %91 : vector<8x128xf32>
    %cst_27 = arith.constant 0.000000e+00 : f32
    %93 = vector.broadcast %cst_27 : f32 to vector<8x128xf32>
    %94 = arith.maximumf %92, %93 : vector<8x128xf32>
    %95 = vector.broadcast %15 : f32 to vector<8x128xf32>
    %96 = arith.mulf %52, %95 : vector<8x128xf32>
    %97 = vector.broadcast %16 : f32 to vector<8x128xf32>
    %98 = arith.mulf %58, %97 : vector<8x128xf32>
    %99 = arith.addf %96, %98 : vector<8x128xf32>
    %100 = vector.broadcast %17 : f32 to vector<8x128xf32>
    %101 = arith.mulf %64, %100 : vector<8x128xf32>
    %102 = arith.addf %99, %101 : vector<8x128xf32>
    %103 = vector.broadcast %18 : f32 to vector<8x128xf32>
    %104 = arith.mulf %70, %103 : vector<8x128xf32>
    %105 = arith.addf %102, %104 : vector<8x128xf32>
    %106 = vector.broadcast %19 : f32 to vector<8x128xf32>
    %107 = arith.mulf %76, %106 : vector<8x128xf32>
    %108 = arith.addf %105, %107 : vector<8x128xf32>
    %109 = vector.broadcast %36 : f32 to vector<8x128xf32>
    %110 = arith.addf %108, %109 : vector<8x128xf32>
    %cst_28 = arith.constant 0.000000e+00 : f32
    %111 = vector.broadcast %cst_28 : f32 to vector<8x128xf32>
    %112 = arith.maximumf %110, %111 : vector<8x128xf32>
    %113 = vector.broadcast %20 : f32 to vector<8x128xf32>
    %114 = arith.mulf %52, %113 : vector<8x128xf32>
    %115 = vector.broadcast %21 : f32 to vector<8x128xf32>
    %116 = arith.mulf %58, %115 : vector<8x128xf32>
    %117 = arith.addf %114, %116 : vector<8x128xf32>
    %118 = vector.broadcast %22 : f32 to vector<8x128xf32>
    %119 = arith.mulf %64, %118 : vector<8x128xf32>
    %120 = arith.addf %117, %119 : vector<8x128xf32>
    %121 = vector.broadcast %23 : f32 to vector<8x128xf32>
    %122 = arith.mulf %70, %121 : vector<8x128xf32>
    %123 = arith.addf %120, %122 : vector<8x128xf32>
    %124 = vector.broadcast %24 : f32 to vector<8x128xf32>
    %125 = arith.mulf %76, %124 : vector<8x128xf32>
    %126 = arith.addf %123, %125 : vector<8x128xf32>
    %127 = vector.broadcast %37 : f32 to vector<8x128xf32>
    %128 = arith.addf %126, %127 : vector<8x128xf32>
    %cst_29 = arith.constant 0.000000e+00 : f32
    %129 = vector.broadcast %cst_29 : f32 to vector<8x128xf32>
    %130 = arith.maximumf %128, %129 : vector<8x128xf32>
    %131 = vector.broadcast %25 : f32 to vector<8x128xf32>
    %132 = arith.mulf %52, %131 : vector<8x128xf32>
    %133 = vector.broadcast %26 : f32 to vector<8x128xf32>
    %134 = arith.mulf %58, %133 : vector<8x128xf32>
    %135 = arith.addf %132, %134 : vector<8x128xf32>
    %136 = vector.broadcast %27 : f32 to vector<8x128xf32>
    %137 = arith.mulf %64, %136 : vector<8x128xf32>
    %138 = arith.addf %135, %137 : vector<8x128xf32>
    %139 = vector.broadcast %28 : f32 to vector<8x128xf32>
    %140 = arith.mulf %70, %139 : vector<8x128xf32>
    %141 = arith.addf %138, %140 : vector<8x128xf32>
    %142 = vector.broadcast %29 : f32 to vector<8x128xf32>
    %143 = arith.mulf %76, %142 : vector<8x128xf32>
    %144 = arith.addf %141, %143 : vector<8x128xf32>
    %145 = vector.broadcast %38 : f32 to vector<8x128xf32>
    %146 = arith.addf %144, %145 : vector<8x128xf32>
    %cst_30 = arith.constant 0.000000e+00 : f32
    %147 = vector.broadcast %cst_30 : f32 to vector<8x128xf32>
    %148 = arith.maximumf %146, %147 : vector<8x128xf32>
    %149 = vector.broadcast %30 : f32 to vector<8x128xf32>
    %150 = arith.mulf %52, %149 : vector<8x128xf32>
    %151 = vector.broadcast %31 : f32 to vector<8x128xf32>
    %152 = arith.mulf %58, %151 : vector<8x128xf32>
    %153 = arith.addf %150, %152 : vector<8x128xf32>
    %154 = vector.broadcast %32 : f32 to vector<8x128xf32>
    %155 = arith.mulf %64, %154 : vector<8x128xf32>
    %156 = arith.addf %153, %155 : vector<8x128xf32>
    %157 = vector.broadcast %33 : f32 to vector<8x128xf32>
    %158 = arith.mulf %70, %157 : vector<8x128xf32>
    %159 = arith.addf %156, %158 : vector<8x128xf32>
    %160 = vector.broadcast %34 : f32 to vector<8x128xf32>
    %161 = arith.mulf %76, %160 : vector<8x128xf32>
    %162 = arith.addf %159, %161 : vector<8x128xf32>
    %163 = vector.broadcast %39 : f32 to vector<8x128xf32>
    %164 = arith.addf %162, %163 : vector<8x128xf32>
    %cst_31 = arith.constant 0.000000e+00 : f32
    %165 = vector.broadcast %cst_31 : f32 to vector<8x128xf32>
    %166 = arith.maximumf %164, %165 : vector<8x128xf32>
    %167 = vector.broadcast %40 : f32 to vector<8x128xf32>
    %168 = arith.mulf %94, %167 : vector<8x128xf32>
    %169 = vector.broadcast %41 : f32 to vector<8x128xf32>
    %170 = arith.mulf %112, %169 : vector<8x128xf32>
    %171 = arith.addf %168, %170 : vector<8x128xf32>
    %172 = vector.broadcast %42 : f32 to vector<8x128xf32>
    %173 = arith.mulf %130, %172 : vector<8x128xf32>
    %174 = arith.addf %171, %173 : vector<8x128xf32>
    %175 = vector.broadcast %43 : f32 to vector<8x128xf32>
    %176 = arith.mulf %148, %175 : vector<8x128xf32>
    %177 = arith.addf %174, %176 : vector<8x128xf32>
    %178 = vector.broadcast %44 : f32 to vector<8x128xf32>
    %179 = arith.mulf %166, %178 : vector<8x128xf32>
    %180 = arith.addf %177, %179 : vector<8x128xf32>
    %181 = vector.broadcast %45 : f32 to vector<8x128xf32>
    %182 = arith.addf %180, %181 : vector<8x128xf32>
    %c0_32 = arith.constant 0 : index
    %c0_33 = arith.constant 0 : index
    %183 = vector.load %arg8[%c0_32, %c0_33] : memref<8x128xf32, #tpu.memory_space<vmem>>, vector<8x128xf32>
    tpu.vector_store %arg8[%c0_32, %c0_33], %182 {strides = array<i32>} : memref<8x128xf32, #tpu.memory_space<vmem>>, vector<8x128xf32>,
    return
  }
  func.func @transform_0(%arg0: i32) -> (i32, i32) {
    %c0_i32 = arith.constant 0 : i32
    %c0_i32_0 = arith.constant 0 : i32
    return %arg0, %c0_i32 : i32, i32
  }
  func.func @transform_1(%arg0: i32) -> i32 {
    %c0_i32 = arith.constant 0 : i32
    %c0_i32_0 = arith.constant 0 : i32
    return %c0_i32 : i32
  }
  func.func @transform_2(%arg0: i32) -> i32 {
    %c0_i32 = arith.constant 0 : i32
    %c0_i32_0 = arith.constant 0 : i32
    return %c0_i32 : i32
  }
  func.func @transform_3(%arg0: i32) -> i32 {
    %c0_i32 = arith.constant 0 : i32
    %c0_i32_0 = arith.constant 0 : i32
    return %c0_i32 : i32
  }
  func.func @transform_4(%arg0: i32) -> i32 {
    %c0_i32 = arith.constant 0 : i32
    %c0_i32_0 = arith.constant 0 : i32
    return %c0_i32 : i32
  }
  func.func @transform_5(%arg0: i32) -> i32 {
    %c0_i32 = arith.constant 0 : i32
    %c0_i32_0 = arith.constant 0 : i32
    return %c0_i32 : i32
  }
  func.func @transform_6(%arg0: i32) -> i32 {
    %c0_i32 = arith.constant 0 : i32
    %c0_i32_0 = arith.constant 0 : i32
    return %c0_i32 : i32
  }
  func.func @transform_7(%arg0: i32) -> (i32, i32) {
    %c0_i32 = arith.constant 0 : i32
    %c0_i32_0 = arith.constant 0 : i32
    return %arg0, %c0_i32 : i32, i32
  }
}

</mosaic_0001>

<llo_original>
// kernel: basic_network_forward.1
$region0: #{basic_network_forward.1}
  #allocation0 [shape = 'u32[]', space=smem, size = 0x4, offset = 0x4, fixed_abs, tag = 'smem constant byte address 0x4 - core index']
  #allocation1 [shape = 'u32[72,128]{1,0:T(1,128)}', space=vmem, size = 0x9000, scoped, tag = 'internal scratch']
  #allocation2 [shape = 'f32[1]{0:T(128)S(6)}', space=smem, size = 0x200, scoped, tag = 'scoped memory for basic_network_forward.1']
  %s0 = inlined_call_operand.vmem [shape: f32[8,128], index: 0, kind: input, shape index: {}]
  %s1 = inlined_call_operand.vmem [shape: f32[5], index: 1, kind: input, shape index: {}]
  %s2 = inlined_call_operand.vmem [shape: f32[5], index: 2, kind: input, shape index: {}]
  %s3 = inlined_call_operand.vmem [shape: f32[25], index: 3, kind: input, shape index: {}]
  %s4 = inlined_call_operand.vmem [shape: f32[5], index: 4, kind: input, shape index: {}]
  %s5 = inlined_call_operand.vmem [shape: f32[5], index: 5, kind: input, shape index: {}]
  %s6 = inlined_call_operand.<no memory space> [shape: f32[1], index: 6, kind: input, shape index: {}]
  %s7 = inlined_call_operand.vmem [shape: f32[8,128], index: 7, kind: output, shape index: {}]
  %s8 = sld [smem:[#allocation0]]
  $region58: #{basic_network_forward.1} parent=0
    _
  %s10 = ssub.s32 1, %s8
  %s11 = scalar_select 0, %s10, %s8
  %12 = sst [smem:[#allocation2]] %s6
  $region1: #{basic_network_forward.1} parent=0
    #allocation3 [shape = 'u8[512]{0}', space=smem, size = 0x200, scoped, tag = 'input window, operand 1, single buffered']
    #allocation4 [shape = 's32[1]{0}', space=sflag, size = 0x4, scoped, tag = 'scoped memory for basic_network_forward.1']
    #allocation5 [shape = 'u8[512]{0}', space=smem, size = 0x200, scoped, tag = 'input window, operand 2, single buffered']
    #allocation6 [shape = 's32[1]{0}', space=sflag, size = 0x4, scoped, tag = 'scoped memory for basic_network_forward.1']
    #allocation7 [shape = 'u8[512]{0}', space=smem, size = 0x200, scoped, tag = 'input window, operand 3, single buffered']
    #allocation8 [shape = 'u8[512]{0}', space=smem, size = 0x200, scoped, tag = 'input window, operand 4, single buffered']
    #allocation9 [shape = 's32[1]{0}', space=sflag, size = 0x4, scoped, tag = 'scoped memory for basic_network_forward.1']
    #allocation10 [shape = 'u8[512]{0}', space=smem, size = 0x200, scoped, tag = 'input window, operand 5, single buffered']
    %13 = vsyncpa [#allocation4], 0
    %14 = vsyncpa [#allocation6], 0
    %15 = vsyncpa [#allocation9], 0
    // Predicated region
    $region2: #{basic_network_forward.1} parent=1 // pred_check
      _
    $region3: #{basic_network_forward.1} parent=1 // pred_check_branch
      %17 = sbr.rel (0) target = $region5
    $region4: #{basic_network_forward.1} parent=1 // pred_region
      _
    $region5: #{basic_network_forward.1} parent=1 // pred_fallthru
      _
    // Predicated region
    $region6: #{basic_network_forward.1} parent=1 // pred_check
      _
    $region7: #{basic_network_forward.1} parent=1 // pred_check_branch
      %19 = sbr.rel (0) target = $region9
    $region8: #{basic_network_forward.1} parent=1 // pred_region
      %21 = vsyncadd [#allocation4], 0
      %s23 = sshll.u32 %s1, 4
      %s24 = int_to_ptr.vmem [resolvable:$true] %s23
      %26 = dma.vmem_to_smem %s24, 16, [#allocation3], [#allocation4]
    $region9: #{basic_network_forward.1} parent=1 // pred_fallthru
      _
    // Predicated region
    $region10: #{basic_network_forward.1} parent=1 // pred_check
      _
    $region11: #{basic_network_forward.1} parent=1 // pred_check_branch
      %28 = sbr.rel (0) target = $region13
    $region12: #{basic_network_forward.1} parent=1 // pred_region
      %30 = vsyncadd [#allocation6], 0
      %s32 = sshll.u32 %s2, 4
      %s33 = int_to_ptr.vmem [resolvable:$true] %s32
      %35 = dma.vmem_to_smem %s33, 16, [#allocation5], [#allocation6]
    $region13: #{basic_network_forward.1} parent=1 // pred_fallthru
      _
    // Predicated region
    $region14: #{basic_network_forward.1} parent=1 // pred_check
      _
    $region15: #{basic_network_forward.1} parent=1 // pred_check_branch
      %37 = sbr.rel (0) target = $region17
    $region16: #{basic_network_forward.1} parent=1 // pred_region
      %39 = vsyncadd [#allocation6], 0
      %s41 = sshll.u32 %s3, 4
      %s42 = int_to_ptr.vmem [resolvable:$true] %s41
      %44 = dma.vmem_to_smem %s42, 16, [#allocation7], [#allocation6]
    $region17: #{basic_network_forward.1} parent=1 // pred_fallthru
      _
    // Predicated region
    $region18: #{basic_network_forward.1} parent=1 // pred_check
      _
    $region19: #{basic_network_forward.1} parent=1 // pred_check_branch
      %46 = sbr.rel (0) target = $region21
    $region20: #{basic_network_forward.1} parent=1 // pred_region
      %48 = vsyncadd [#allocation9], 0
      %s50 = sshll.u32 %s4, 4
      %s51 = int_to_ptr.vmem [resolvable:$true] %s50
      %53 = dma.vmem_to_smem %s51, 16, [#allocation8], [#allocation9]
    $region21: #{basic_network_forward.1} parent=1 // pred_fallthru
      _
    // Predicated region
    $region22: #{basic_network_forward.1} parent=1 // pred_check
      _
    $region23: #{basic_network_forward.1} parent=1 // pred_check_branch
      %55 = sbr.rel (0) target = $region25
    $region24: #{basic_network_forward.1} parent=1 // pred_region
      %57 = vsyncadd [#allocation9], 0
      %s59 = sshll.u32 %s5, 4
      %s60 = int_to_ptr.vmem [resolvable:$true] %s59
      %62 = dma.vmem_to_smem %s60, 16, [#allocation10], [#allocation9]
    $region25: #{basic_network_forward.1} parent=1 // pred_fallthru
      _
    // Predicated region
    $region26: #{basic_network_forward.1} parent=1 // pred_check
      _
    $region27: #{basic_network_forward.1} parent=1 // pred_check_branch
      %64 = sbr.rel (0) target = $region29
    $region28: #{basic_network_forward.1} parent=1 // pred_region
      _
    $region29: #{basic_network_forward.1} parent=1 // pred_fallthru
      _
    // Predicated region
    $region30: #{basic_network_forward.1} parent=1 // pred_check
      _
    $region31: #{basic_network_forward.1} parent=1 // pred_check_branch
      %66 = sbr.rel (0) target = $region33
    $region32: #{basic_network_forward.1} parent=1 // pred_region
      %68 = dma.done [#allocation4], 16
    $region33: #{basic_network_forward.1} parent=1 // pred_fallthru
      _
    // Predicated region
    $region34: #{basic_network_forward.1} parent=1 // pred_check
      _
    $region35: #{basic_network_forward.1} parent=1 // pred_check_branch
      %70 = sbr.rel (0) target = $region37
    $region36: #{basic_network_forward.1} parent=1 // pred_region
      %72 = dma.done [#allocation6], 16
    $region37: #{basic_network_forward.1} parent=1 // pred_fallthru
      _
    // Predicated region
    $region38: #{basic_network_forward.1} parent=1 // pred_check
      _
    $region39: #{basic_network_forward.1} parent=1 // pred_check_branch
      %74 = sbr.rel (0) target = $region41
    $region40: #{basic_network_forward.1} parent=1 // pred_region
      %76 = dma.done [#allocation6], 16
    $region41: #{basic_network_forward.1} parent=1 // pred_fallthru
      _
    // Predicated region
    $region42: #{basic_network_forward.1} parent=1 // pred_check
      _
    $region43: #{basic_network_forward.1} parent=1 // pred_check_branch
      %78 = sbr.rel (0) target = $region45
    $region44: #{basic_network_forward.1} parent=1 // pred_region
      %80 = dma.done [#allocation9], 16
    $region45: #{basic_network_forward.1} parent=1 // pred_fallthru
      _
    // Predicated region
    $region46: #{basic_network_forward.1} parent=1 // pred_check
      _
    $region47: #{basic_network_forward.1} parent=1 // pred_check_branch
      %82 = sbr.rel (0) target = $region49
    $region48: #{basic_network_forward.1} parent=1 // pred_region
      %84 = dma.done [#allocation9], 16
    $region49: #{basic_network_forward.1} parent=1 // pred_fallthru
      _
    %85 = sfence
    %s86 = sld [smem:[#allocation3]]
    %s87 = sld [smem:[#allocation3 + $0x1]]
    %s88 = sld [smem:[#allocation3 + $0x2]]
    %s89 = sld [smem:[#allocation3 + $0x3]]
    %s90 = sld [smem:[#allocation3 + $0x4]]
    %s91 = sld [smem:[#allocation5]]
    %s92 = sld [smem:[#allocation5 + $0x1]]
    %s93 = sld [smem:[#allocation5 + $0x2]]
    %s94 = sld [smem:[#allocation5 + $0x3]]
    %s95 = sld [smem:[#allocation5 + $0x4]]
    %s96 = sld [smem:[#allocation7]]
    %s97 = sld [smem:[#allocation7 + $0x1]]
    %s98 = sld [smem:[#allocation7 + $0x2]]
    %s99 = sld [smem:[#allocation7 + $0x3]]
    %s100 = sld [smem:[#allocation7 + $0x4]]
    %s101 = sld [smem:[#allocation7 + $0x5]]
    %s102 = sld [smem:[#allocation7 + $0x6]]
    %s103 = sld [smem:[#allocation7 + $0x7]]
    %s104 = sld [smem:[#allocation7 + $0x8]]
    %s105 = sld [smem:[#allocation7 + $0x9]]
    %s106 = sld [smem:[#allocation7 + $0xa]]
    %s107 = sld [smem:[#allocation7 + $0xb]]
    %s108 = sld [smem:[#allocation7 + $0xc]]
    %s109 = sld [smem:[#allocation7 + $0xd]]
    %s110 = sld [smem:[#allocation7 + $0xe]]
    %s111 = sld [smem:[#allocation7 + $0xf]]
    %s112 = sld [smem:[#allocation7 + $0x10]]
    %s113 = sld [smem:[#allocation7 + $0x11]]
    %s114 = sld [smem:[#allocation7 + $0x12]]
    %s115 = sld [smem:[#allocation7 + $0x13]]
    %s116 = sld [smem:[#allocation7 + $0x14]]
    %s117 = sld [smem:[#allocation7 + $0x15]]
    %s118 = sld [smem:[#allocation7 + $0x16]]
    %s119 = sld [smem:[#allocation7 + $0x17]]
    %s120 = sld [smem:[#allocation7 + $0x18]]
    %s121 = sld [smem:[#allocation8]]
    %s122 = sld [smem:[#allocation8 + $0x1]]
    %s123 = sld [smem:[#allocation8 + $0x2]]
    %s124 = sld [smem:[#allocation8 + $0x3]]
    %s125 = sld [smem:[#allocation8 + $0x4]]
    %s126 = sld [smem:[#allocation10]]
    %s127 = sld [smem:[#allocation10 + $0x1]]
    %s128 = sld [smem:[#allocation10 + $0x2]]
    %s129 = sld [smem:[#allocation10 + $0x3]]
    %s130 = sld [smem:[#allocation10 + $0x4]]
    %s131 = sld [smem:[#allocation2]]
    %v132 = vld [vmem:[%s0] sm:$0xff]
    %v133 = vstv %s86
    %v134 = vmul.f32 %v132, %v133
    %v135 = vstv %s91
    %v136 = vadd.f32 %v134, %v135
    %v137 = vmax.f32 %v136, 0.0
    %v138 = vstv %s87
    %v139 = vmul.f32 %v132, %v138
    %v140 = vstv %s92
    %v141 = vadd.f32 %v139, %v140
    %v142 = vmax.f32 %v141, 0.0
    %v143 = vstv %s88
    %v144 = vmul.f32 %v132, %v143
    %v145 = vstv %s93
    %v146 = vadd.f32 %v144, %v145
    %v147 = vmax.f32 %v146, 0.0
    %v148 = vstv %s89
    %v149 = vmul.f32 %v132, %v148
    %v150 = vstv %s94
    %v151 = vadd.f32 %v149, %v150
    %v152 = vmax.f32 %v151, 0.0
    %v153 = vstv %s90
    %v154 = vmul.f32 %v132, %v153
    %v155 = vstv %s95
    %v156 = vadd.f32 %v154, %v155
    %v157 = vmax.f32 %v156, 0.0
    %v158 = vstv %s96
    %v159 = vmul.f32 %v137, %v158
    %v160 = vstv %s97
    %v161 = vmul.f32 %v142, %v160
    %v162 = vadd.f32 %v159, %v161
    %v163 = vstv %s98
    %v164 = vmul.f32 %v147, %v163
    %v165 = vadd.f32 %v162, %v164
    %v166 = vstv %s99
    %v167 = vmul.f32 %v152, %v166
    %v168 = vadd.f32 %v165, %v167
    %v169 = vstv %s100
    %v170 = vmul.f32 %v157, %v169
    %v171 = vadd.f32 %v168, %v170
    %v172 = vstv %s121
    %v173 = vadd.f32 %v171, %v172
    %v174 = vmax.f32 %v173, 0.0
    %v175 = vstv %s101
    %v176 = vmul.f32 %v137, %v175
    %v177 = vstv %s102
    %v178 = vmul.f32 %v142, %v177
    %v179 = vadd.f32 %v176, %v178
    %v180 = vstv %s103
    %v181 = vmul.f32 %v147, %v180
    %v182 = vadd.f32 %v179, %v181
    %v183 = vstv %s104
    %v184 = vmul.f32 %v152, %v183
    %v185 = vadd.f32 %v182, %v184
    %v186 = vstv %s105
    %v187 = vmul.f32 %v157, %v186
    %v188 = vadd.f32 %v185, %v187
    %v189 = vstv %s122
    %v190 = vadd.f32 %v188, %v189
    %v191 = vmax.f32 %v190, 0.0
    %v192 = vstv %s106
    %v193 = vmul.f32 %v137, %v192
    %v194 = vstv %s107
    %v195 = vmul.f32 %v142, %v194
    %v196 = vadd.f32 %v193, %v195
    %v197 = vstv %s108
    %v198 = vmul.f32 %v147, %v197
    %v199 = vadd.f32 %v196, %v198
    %v200 = vstv %s109
    %v201 = vmul.f32 %v152, %v200
    %v202 = vadd.f32 %v199, %v201
    %v203 = vstv %s110
    %v204 = vmul.f32 %v157, %v203
    %v205 = vadd.f32 %v202, %v204
    %v206 = vstv %s123
    %v207 = vadd.f32 %v205, %v206
    %v208 = vmax.f32 %v207, 0.0
    %v209 = vstv %s111
    %v210 = vmul.f32 %v137, %v209
    %v211 = vstv %s112
    %v212 = vmul.f32 %v142, %v211
    %v213 = vadd.f32 %v210, %v212
    %v214 = vstv %s113
    %v215 = vmul.f32 %v147, %v214
    %v216 = vadd.f32 %v213, %v215
    %v217 = vstv %s114
    %v218 = vmul.f32 %v152, %v217
    %v219 = vadd.f32 %v216, %v218
    %v220 = vstv %s115
    %v221 = vmul.f32 %v157, %v220
    %v222 = vadd.f32 %v219, %v221
    %v223 = vstv %s124
    %v224 = vadd.f32 %v222, %v223
    %v225 = vmax.f32 %v224, 0.0
    %v226 = vstv %s116
    %v227 = vmul.f32 %v137, %v226
    %v228 = vstv %s117
    %v229 = vmul.f32 %v142, %v228
    %v230 = vadd.f32 %v227, %v229
    %v231 = vstv %s118
    %v232 = vmul.f32 %v147, %v231
    %v233 = vadd.f32 %v230, %v232
    %v234 = vstv %s119
    %v235 = vmul.f32 %v152, %v234
    %v236 = vadd.f32 %v233, %v235
    %v237 = vstv %s120
    %v238 = vmul.f32 %v157, %v237
    %v239 = vadd.f32 %v236, %v238
    %v240 = vstv %s125
    %v241 = vadd.f32 %v239, %v240
    %v242 = vmax.f32 %v241, 0.0
    %v243 = vstv %s126
    %v244 = vmul.f32 %v174, %v243
    %v245 = vstv %s127
    %v246 = vmul.f32 %v191, %v245
    %v247 = vadd.f32 %v244, %v246
    %v248 = vstv %s128
    %v249 = vmul.f32 %v208, %v248
    %v250 = vadd.f32 %v247, %v249
    %v251 = vstv %s129
    %v252 = vmul.f32 %v225, %v251
    %v253 = vadd.f32 %v250, %v252
    %v254 = vstv %s130
    %v255 = vmul.f32 %v242, %v254
    %v256 = vadd.f32 %v253, %v255
    %v257 = vstv %s131
    %v258 = vadd.f32 %v256, %v257
    %259 = vst [vmem:[%s7] sm:$0xff] %v258
    // Predicated region
    $region50: #{basic_network_forward.1} parent=1 // pred_check
      _
    $region51: #{basic_network_forward.1} parent=1 // pred_check_branch
      %261 = sbr.rel (0) target = $region53
    $region52: #{basic_network_forward.1} parent=1 // pred_region
      _
    $region53: #{basic_network_forward.1} parent=1 // pred_fallthru
      _
    // Predicated region
    $region54: #{basic_network_forward.1} parent=1 // pred_check
      _
    $region55: #{basic_network_forward.1} parent=1 // pred_check_branch
      %263 = sbr.rel (0) target = $region57
    $region56: #{basic_network_forward.1} parent=1 // pred_region
      _
    $region57: #{basic_network_forward.1} parent=1 // pred_fallthru
      _
    %264 = vsyncpa [#allocation4], 1
    %265 = vsyncpa [#allocation6], 1
    %266 = vsyncpa [#allocation9], 1

</llo_original>
